<compile_context>
chip_gen: v5e
topology: v5e:2x2
jax: 0.10.0
libtpu: 0.0.40
codegen_flags: <defaults>
</compile_context>

<pallas_src>
import functools

import jax
import jax.numpy as jnp
from jax import lax
from jax.experimental import pallas as pl
from jax.experimental.pallas import tpu as pltpu

_MIB = 1024 * 1024

# Set True to use exact f32 softmax reciprocal + f32 probabilities (validation path);
# the default approx path uses the EUP vrcp (separate bundle slot, essentially free).
_EXACT_SOFTMAX = False


def _vmem_limit_bytes():
    """Per-generation scoped-VMEM budget: physical VMEM minus ~16 MiB headroom.

    v5e/v6e (128 MiB physical) -> 112 MiB, v7x (64 MiB/TC) -> 48 MiB,
    unknown -> conservative 48 MiB."""
    try:
        cap = int(pltpu.get_tpu_info().vmem_capacity_bytes)
    except Exception:
        cap = 64 * _MIB
    return max(32 * _MIB, min(cap - 16 * _MIB, 112 * _MIB))


_VMEM_LIMIT = _vmem_limit_bytes()


@functools.lru_cache(maxsize=None)
def _buffered_supported():
    """Feature-probe pl.Buffered(1) single-buffering of constant-index blocks."""
    try:
        def k(x_ref, o_ref):
            o_ref[...] = x_ref[...]

        x = jnp.zeros((8, 128), jnp.float32)
        jax.block_until_ready(pl.pallas_call(
            k, out_shape=jax.ShapeDtypeStruct((8, 128), jnp.float32),
            grid=(1,),
            in_specs=[pl.BlockSpec((8, 128), lambda i: (0, 0),
                                   pipeline_mode=pl.Buffered(1))],
            out_specs=pl.BlockSpec((8, 128), lambda i: (0, 0)),
        )(x))
        return True
    except Exception:
        return False


def _const_spec(shape, index_map):
    """BlockSpec for weights/params whose block index never changes.

    Single-buffered (pl.Buffered(1)) so resident weights are not double-buffered,
    freeing roughly half the weight VMEM footprint (decisive on v7x's 64 MiB/TC)."""
    if _buffered_supported():
        return pl.BlockSpec(shape, index_map, pipeline_mode=pl.Buffered(1))
    return pl.BlockSpec(shape, index_map)


def _pick_row_tile(M, pref):
    """Largest row tile <= pref that divides M (multiple of 8 when < M)."""
    t = min(pref, M)
    while t > 8 and M % t != 0:
        t -= 8
    return t if M % t == 0 else M


# ------------------------------------------------------------------ attention block

def _attn_block_kernel(vl_ref, x_ref, wqkv_ref, bqkv_ref, wo_ref, bo_ref,
                       g_ref, b_ref, o_ref, attn_sc, *, n_heads, eps):
    b = pl.program_id(0)
    vl = vl_ref[b]                                   # scalar valid length (SMEM)
    x = x_ref[0]                                     # (S, H) bf16
    S, H = x.shape
    Dh = H // n_heads

    # Fused QKV projection on the MXU; 1/sqrt(Dh) is pre-folded into the Q columns.
    qkv = jnp.dot(x, wqkv_ref[...], preferred_element_type=jnp.float32)
    # Downcast once (not per head): halves the live (S, 3H) activation and collapses
    # 3*n_heads per-head converts into a single one.
    qkv16 = (qkv + bqkv_ref[...]).astype(jnp.bfloat16)

    # d2l masked_softmax semantics: key positions >= valid_len get -1e6 before softmax.
    # Use a (1, S) additive bias row instead of an (S, S) bool mask kept live across heads.
    kbias = jnp.where(lax.broadcasted_iota(jnp.int32, (1, S), 1) < vl,
                      0.0, -1e6).astype(jnp.float32)

    # Per-head attention. Each head's (S, Dh) result is stored straight into the f32
    # VMEM scratch slab, so score tensors / head outputs do not stay live across
    # iterations and there is no value-level concatenate (no relayout copies).
    # TODO(synk): for S >~ 512 switch to flash-style KV tiling (online softmax) and add
    # a query-row grid axis so the (S, S) scores never materialize (v7x especially).
    for h in range(n_heads):
        qh = qkv16[:, h * Dh:(h + 1) * Dh]
        kh = qkv16[:, H + h * Dh:H + (h + 1) * Dh]
        vh = qkv16[:, 2 * H + h * Dh:2 * H + (h + 1) * Dh]
        scores = lax.dot_general(qh, kh, (((1,), (1,)), ((), ())),
                                 preferred_element_type=jnp.float32)    # (S, S)
        scores = scores + kbias
        m = jnp.max(scores, axis=-1, keepdims=True)
        p = jnp.exp(scores - m)
        l = jnp.sum(p, axis=-1, keepdims=True)
        if _EXACT_SOFTMAX:
            attn_sc[:, h * Dh:(h + 1) * Dh] = jnp.dot(
                (p / l).astype(jnp.bfloat16), vh,
                preferred_element_type=jnp.float32)
        else:
            pv = jnp.dot(p.astype(jnp.bfloat16), vh,
                         preferred_element_type=jnp.float32)            # (S, Dh)
            # Row-normalize after p@V: diag(1/l) (p V) == (diag(1/l) p) V, but the
            # scale touches (S, Dh) instead of (S, S).
            attn_sc[:, h * Dh:(h + 1) * Dh] = pv * pl.reciprocal(l, approx=True)

    # Fused output projection + residual add + LayerNorm (f32 statistics).
    proj = jnp.dot(attn_sc[...].astype(jnp.bfloat16), wo_ref[...],
                   preferred_element_type=jnp.float32) + bo_ref[...]
    z = x.astype(jnp.float32) + proj
    mu = jnp.mean(z, axis=-1, keepdims=True)
    var = jnp.mean(jnp.square(z - mu), axis=-1, keepdims=True)
    zn = (z - mu) * lax.rsqrt(var + eps)
    o_ref[0] = (zn * g_ref[...] + b_ref[...]).astype(o_ref.dtype)


def attention_block(x, valid_lens, wqkv, bqkv, wo, bo, gamma, beta, n_heads, eps=1e-5):
    """Fused (QKV -> masked MHA -> Wo -> Add&LN). x:(B,S,H) bf16 -> (B,S,H) bf16."""
    B, S, H = x.shape
    row = pl.BlockSpec((1, S, H), lambda b, vl: (b, 0, 0))

    def cw(shape):
        return _const_spec(shape, lambda b, vl: (0, 0))

    nh, Dh = n_heads, H // n_heads
    flops = B * (2 * S * H * 3 * H + nh * 4 * S * S * Dh + 2 * S * H * H)
    bytes_accessed = (2 * B * S * H * 2                 # activations in/out (bf16)
                      + (H * 3 * H + H * H) * 2         # weights (bf16)
                      + (3 * H + 4 * H) * 4 + B * 4)    # biases / LN params / valid_lens

    return pl.pallas_call(
        functools.partial(_attn_block_kernel, n_heads=n_heads, eps=eps),
        out_shape=jax.ShapeDtypeStruct((B, S, H), jnp.bfloat16),
        grid_spec=pltpu.PrefetchScalarGridSpec(
            num_scalar_prefetch=1,
            grid=(B,),
            in_specs=[row,
                      cw((H, 3 * H)), cw((1, 3 * H)),
                      cw((H, H)), cw((1, H)),
                      cw((1, H)), cw((1, H))],
            out_specs=row,
            scratch_shapes=[pltpu.VMEM((S, H), jnp.float32)],
        ),
        compiler_params=pltpu.CompilerParams(
            dimension_semantics=("parallel",),
            vmem_limit_bytes=_VMEM_LIMIT),
        cost_estimate=pl.CostEstimate(
            flops=flops, transcendentals=B * nh * S * S,
            bytes_accessed=bytes_accessed),
    )(valid_lens, x, wqkv, bqkv, wo, bo, gamma, beta)


# ------------------------------------------------------------------ FFN block

def _ffn_block_kernel(y_ref, w1_ref, b1_ref, w2_ref, b2_ref, g_ref, b_ref,
                      o_ref, *, eps, f_chunk):
    y = y_ref[...]                                   # (tm, H) bf16
    F = w1_ref.shape[1]
    Ho = w2_ref.shape[1]
    tf = min(f_chunk, F)

    # Chunk the contraction over the ffn dimension so the (tm, F) f32 intermediate
    # never fully materializes (bounds peak VMEM on v7x); with a single chunk this is
    # exactly the fused W1 -> relu -> W2.
    acc = jnp.zeros((y.shape[0], Ho), jnp.float32)
    for c0 in range(0, F, tf):
        c1 = min(c0 + tf, F)
        h = jnp.dot(y, w1_ref[:, c0:c1], preferred_element_type=jnp.float32)
        h = jnp.maximum(h + b1_ref[:, c0:c1], 0.0)
        acc = acc + jnp.dot(h.astype(jnp.bfloat16), w2_ref[c0:c1, :],
                            preferred_element_type=jnp.float32)

    z = y.astype(jnp.float32) + acc + b2_ref[...]
    mu = jnp.mean(z, axis=-1, keepdims=True)
    var = jnp.mean(jnp.square(z - mu), axis=-1, keepdims=True)
    zn = (z - mu) * lax.rsqrt(var + eps)
    o_ref[...] = (zn * g_ref[...] + b_ref[...]).astype(o_ref.dtype)


def ffn_block(y, w1, b1, w2, b2, gamma, beta, eps=1e-5, f_chunk=1024):
    """Fused (W1 -> relu -> W2 -> Add&LN). y:(M,H) bf16 -> (M,H) bf16, tiled over rows."""
    M, H = y.shape
    F = w1.shape[1]
    # 512-row tiles on 128 MiB parts (v5e/v6e) for ~85%+ of HBM roofline; 256 on v7x
    # (64 MiB/TC). Single-buffered weights (Buffered(1)) make the bigger tile fit.
    tm = _pick_row_tile(M, pref=512 if _VMEM_LIMIT >= 96 * _MIB else 256)

    def cw(shape):
        return _const_spec(shape, lambda i: (0, 0))

    flops = 4 * M * H * F
    bytes_accessed = 2 * M * H * 2 + 2 * H * F * 2 + (2 * F + 4 * H) * 4

    return pl.pallas_call(
        functools.partial(_ffn_block_kernel, eps=eps, f_chunk=f_chunk),
        out_shape=jax.ShapeDtypeStruct((M, H), jnp.bfloat16),
        grid=(M // tm,),
        in_specs=[pl.BlockSpec((tm, H), lambda i: (i, 0)),
                  cw((H, F)), cw((1, F)),
                  cw((F, H)), cw((1, H)),
                  cw((1, H)), cw((1, H))],
        out_specs=pl.BlockSpec((tm, H), lambda i: (i, 0)),
        compiler_params=pltpu.CompilerParams(
            dimension_semantics=("parallel",),
            vmem_limit_bytes=_VMEM_LIMIT),
        cost_estimate=pl.CostEstimate(
            flops=flops, transcendentals=0, bytes_accessed=bytes_accessed),
    )(y, w1, b1, w2, b2, gamma, beta)


# ------------------------------------------------------------------ model glue

def init_params(key, vocab_size, H, ffn_h, n_layers, n_classes, max_len,
                n_heads, n_segments=2):
    def nrm(k, shape, scale=0.02):
        return scale * jax.random.normal(k, shape, dtype=jnp.float32)

    keys = iter(jax.random.split(key, 5 + 6 * n_layers))
    attn_scale = 1.0 / float(H // n_heads) ** 0.5
    p = {
        "tok_emb": nrm(next(keys), (vocab_size, H)),
        "seg_emb": nrm(next(keys), (n_segments, H)),
        "pos_emb": nrm(next(keys), (1, max_len, H)),
        "blocks": [],
        "Wh": nrm(next(keys), (H, H)), "bh": jnp.zeros((H,), jnp.float32),
        "Wc": nrm(next(keys), (H, n_classes)), "bc": jnp.zeros((n_classes,), jnp.float32),
    }
    for _ in range(n_layers):
        Wq = nrm(next(keys), (H, H))
        Wk = nrm(next(keys), (H, H))
        Wv = nrm(next(keys), (H, H))
        Wo = nrm(next(keys), (H, H))
        W1 = nrm(next(keys), (H, ffn_h))
        W2 = nrm(next(keys), (ffn_h, H))
        bq = bk = bv = jnp.zeros((H,), jnp.float32)
        # Concatenate QKV into one (H, 3H) weight; fold 1/sqrt(Dh) into the Q part once.
        Wqkv = jnp.concatenate([Wq * attn_scale, Wk, Wv], axis=1)
        bqkv = jnp.concatenate([bq * attn_scale, bk, bv]).reshape(1, 3 * H)
        p["blocks"].append({
            "Wqkv": Wqkv.astype(jnp.bfloat16),
            "bqkv": bqkv,
            "Wo": Wo.astype(jnp.bfloat16), "bo": jnp.zeros((1, H), jnp.float32),
            "ln1_g": jnp.ones((1, H), jnp.float32), "ln1_b": jnp.zeros((1, H), jnp.float32),
            "W1": W1.astype(jnp.bfloat16), "b1": jnp.zeros((1, ffn_h), jnp.float32),
            "W2": W2.astype(jnp.bfloat16), "b2": jnp.zeros((1, H), jnp.float32),
            "ln2_g": jnp.ones((1, H), jnp.float32), "ln2_b": jnp.zeros((1, H), jnp.float32),
        })
    return p


def bert_text_tagging_forward(params, tokens, segments, valid_lens, n_heads):
    B, S = tokens.shape
    H = params["tok_emb"].shape[1]

    # Embedding gathers stay in XLA (glue); activations carried in bf16 between kernels.
    X = (params["tok_emb"][tokens] + params["seg_emb"][segments]
         + params["pos_emb"][:, :S, :])
    X = X.astype(jnp.bfloat16)                                  # (B, S, H)

    # TODO(synk): optionally fuse attention_block + ffn_block per layer (saves one HBM
    # round trip of X per layer, ~3-8%, largest on v5e).
    for blk in params["blocks"]:
        X = attention_block(X, valid_lens, blk["Wqkv"], blk["bqkv"],
                            blk["Wo"], blk["bo"], blk["ln1_g"], blk["ln1_b"],
                            n_heads)                            # (B, S, H) bf16
        Y = ffn_block(X.reshape(B * S, H), blk["W1"], blk["b1"],
                      blk["W2"], blk["b2"], blk["ln2_g"], blk["ln2_b"])
        X = Y.reshape(B, S, H)

    # Classification head in plain XLA: (B, n_classes=3) output and B < 8 rows are
    # below TPU tile granularity; a pallas_call here would be pure launch overhead.
    cls = X[:, 0, :].astype(jnp.float32)                        # encoder_X[:, 0, :]
    hidden_out = jnp.tanh(cls @ params["Wh"] + params["bh"])    # pretrain_bert.hidden
    logits = hidden_out @ params["Wc"] + params["bc"]           # LazyLinear(n_classes)
    return logits


# ------------------------------------------------------------------ main

if __name__ == "__main__":
    B, S, H = 2, 8, 32
    N_HEADS, FFN_H, N_LAYERS = 2, 64, 2
    VOCAB, MAX_LEN, N_CLASSES = 100, 16, 3

    # Prime the Buffered(1) feature probe outside of jit tracing.
    _buffered_supported()

    key = jax.random.PRNGKey(0)
    k_params, k_tok, k_seg = jax.random.split(key, 3)

    params = init_params(k_params, VOCAB, H, FFN_H, N_LAYERS, N_CLASSES,
                         MAX_LEN, N_HEADS)
    tokens = jax.random.randint(k_tok, (B, S), 0, VOCAB, dtype=jnp.int32)
    segments = jax.random.randint(k_seg, (B, S), 0, 2, dtype=jnp.int32)
    valid_lens = jnp.array([8, 5], dtype=jnp.int32)

    # NOTE: these demo shapes (H=32, S=8) are below (8,128) tile granularity, so any
    # timing here measures launch/pipeline overhead only, not kernel throughput.
    fwd = jax.jit(functools.partial(bert_text_tagging_forward, n_heads=N_HEADS))
    logits = fwd(params, tokens, segments, valid_lens)
    logits = jax.block_until_ready(logits)
    assert logits.shape == (B, N_CLASSES)
    print("KERNEL_OK")
</pallas_src>

<mosaic_0001>
module attributes {stable_mosaic.version = 11 : i64} {
  func.func @k(%arg0: i32, %arg1: memref<8x128xf32, #tpu.memory_space<vmem>>, %arg2: memref<8x128xf32, #tpu.memory_space<vmem>>) attributes {dimension_semantics = [#tpu.dimension_semantics<arbitrary>], iteration_bounds = array<i64: 1>, scalar_prefetch = 0 : i64, scratch_operands = 0 : i64, tpu.core_type = #tpu.core_type<tc>, window_params = [{pipeline_mode = #tpu.pipeline_mode<synchronous>, transform_indices = @transform_0, window_bounds = array<i64: 8, 128>}, {pipeline_mode = #tpu.pipeline_mode<synchronous>, transform_indices = @transform_1, window_bounds = array<i64: 8, 128>}]} {
    %c0 = arith.constant 0 : index
    %c0_0 = arith.constant 0 : index
    %0 = vector.load %arg1[%c0, %c0_0] : memref<8x128xf32, #tpu.memory_space<vmem>>, vector<8x128xf32>
    %c0_1 = arith.constant 0 : index
    %c0_2 = arith.constant 0 : index
    %1 = vector.load %arg2[%c0_1, %c0_2] : memref<8x128xf32, #tpu.memory_space<vmem>>, vector<8x128xf32>
    tpu.vector_store %arg2[%c0_1, %c0_2], %0 {strides = array<i32>} : memref<8x128xf32, #tpu.memory_space<vmem>>, vector<8x128xf32>,
    return
  }
  func.func @transform_0(%arg0: i32) -> (i32, i32) {
    %c0_i32 = arith.constant 0 : i32
    %c0_i32_0 = arith.constant 0 : i32
    %c0_i32_1 = arith.constant 0 : i32
    return %c0_i32, %c0_i32_0 : i32, i32
  }
  func.func @transform_1(%arg0: i32) -> (i32, i32) {
    %c0_i32 = arith.constant 0 : i32
    %c0_i32_0 = arith.constant 0 : i32
    %c0_i32_1 = arith.constant 0 : i32
    return %c0_i32, %c0_i32_0 : i32, i32
  }
}

module attributes {stable_mosaic.version = 11 : i64} {
  func.func @_ffn_block_kernel(%arg0: i32, %arg1: memref<16x32xbf16, #tpu.memory_space<vmem>>, %arg2: memref<32x64xbf16, #tpu.memory_space<vmem>>, %arg3: memref<1x64xf32, #tpu.memory_space<vmem>>, %arg4: memref<64x32xbf16, #tpu.memory_space<vmem>>, %arg5: memref<1x32xf32, #tpu.memory_space<vmem>>, %arg6: memref<1x32xf32, #tpu.memory_space<vmem>>, %arg7: memref<1x32xf32, #tpu.memory_space<vmem>>, %arg8: memref<16x32xbf16, #tpu.memory_space<vmem>>) attributes {dimension_semantics = [#tpu.dimension_semantics<parallel>], iteration_bounds = array<i64: 1>, scalar_prefetch = 0 : i64, scratch_operands = 0 : i64, tpu.core_type = #tpu.core_type<tc>, window_params = [{transform_indices = @transform_0, window_bounds = array<i64: 16, 32>}, {pipeline_mode = #tpu.pipeline_mode<synchronous>, transform_indices = @transform_1, window_bounds = array<i64: 32, 64>}, {pipeline_mode = #tpu.pipeline_mode<synchronous>, transform_indices = @transform_2, window_bounds = array<i64: 1, 64>}, {pipeline_mode = #tpu.pipeline_mode<synchronous>, transform_indices = @transform_3, window_bounds = array<i64: 64, 32>}, {pipeline_mode = #tpu.pipeline_mode<synchronous>, transform_indices = @transform_4, window_bounds = array<i64: 1, 32>}, {pipeline_mode = #tpu.pipeline_mode<synchronous>, transform_indices = @transform_5, window_bounds = array<i64: 1, 32>}, {pipeline_mode = #tpu.pipeline_mode<synchronous>, transform_indices = @transform_6, window_bounds = array<i64: 1, 32>}, {transform_indices = @transform_7, window_bounds = array<i64: 16, 32>}]} {
    %c0 = arith.constant 0 : index
    %c0_0 = arith.constant 0 : index
    %0 = vector.load %arg1[%c0, %c0_0] : memref<16x32xbf16, #tpu.memory_space<vmem>>, vector<16x32xbf16>
    %cst = arith.constant 0.000000e+00 : f32
    %1 = vector.broadcast %cst : f32 to vector<16x32xf32>
    %c0_1 = arith.constant 0 : index
    %c0_2 = arith.constant 0 : index
    %2 = vector.load %arg2[%c0_1, %c0_2] : memref<32x64xbf16, #tpu.memory_space<vmem>>, vector<32x64xbf16>
    %cst_3 = arith.constant dense<0.000000e+00> : vector<16x64xf32>
    %3 = tpu.matmul %0, %2, %cst_3 {dimension_numbers = #tpu.dot_dimension_numbers<[1], [0], [0], [1], [0, 0, 1, 1], [], []>} : vector<16x32xbf16>, vector<32x64xbf16>, vector<16x64xf32> -> vector<16x64xf32>
    %c0_4 = arith.constant 0 : index
    %c0_5 = arith.constant 0 : index
    %4 = vector.load %arg3[%c0_4, %c0_5] : memref<1x64xf32, #tpu.memory_space<vmem>>, vector<1x64xf32>
    %5 = vector.broadcast %4 : vector<1x64xf32> to vector<16x64xf32>
    %6 = arith.addf %3, %5 : vector<16x64xf32>
    %cst_6 = arith.constant 0.000000e+00 : f32
    %7 = vector.broadcast %cst_6 : f32 to vector<16x64xf32>
    %8 = arith.maximumf %6, %7 : vector<16x64xf32>
    %9 = arith.truncf %8 : vector<16x64xf32> to vector<16x64xbf16>
    %c0_7 = arith.constant 0 : index
    %c0_8 = arith.constant 0 : index
    %10 = vector.load %arg4[%c0_7, %c0_8] : memref<64x32xbf16, #tpu.memory_space<vmem>>, vector<64x32xbf16>
    %cst_9 = arith.constant dense<0.000000e+00> : vector<16x32xf32>
    %11 = tpu.matmul %9, %10, %cst_9 {dimension_numbers = #tpu.dot_dimension_numbers<[1], [0], [0], [1], [0, 0, 1, 1], [], []>} : vector<16x64xbf16>, vector<64x32xbf16>, vector<16x32xf32> -> vector<16x32xf32>
    %12 = arith.addf %1, %11 : vector<16x32xf32>
    %13 = arith.extf %0 : vector<16x32xbf16> to vector<16x32xf32>
    %14 = arith.addf %13, %12 : vector<16x32xf32>
    %c0_10 = arith.constant 0 : index
    %c0_11 = arith.constant 0 : index
    %15 = vector.load %arg5[%c0_10, %c0_11] : memref<1x32xf32, #tpu.memory_space<vmem>>, vector<1x32xf32>
    %16 = vector.broadcast %15 : vector<1x32xf32> to vector<16x32xf32>
    %17 = arith.addf %14, %16 : vector<16x32xf32>
    %cst_12 = arith.constant dense<0.000000e+00> : vector<16xf32>
    %18 = vector.multi_reduction <add>, %17, %cst_12 [1] : vector<16x32xf32> to vector<16xf32>
    %19 = vector.shape_cast %18 : vector<16xf32> to vector<16x1xf32>
    %cst_13 = arith.constant 3.200000e+01 : f32
    %20 = vector.broadcast %cst_13 : f32 to vector<16x1xf32>
    %21 = arith.divf %19, %20 : vector<16x1xf32>
    %22 = vector.broadcast %21 : vector<16x1xf32> to vector<16x32xf32>
    %23 = arith.subf %17, %22 : vector<16x32xf32>
    %24 = arith.mulf %23, %23 : vector<16x32xf32>
    %cst_14 = arith.constant dense<0.000000e+00> : vector<16xf32>
    %25 = vector.multi_reduction <add>, %24, %cst_14 [1] : vector<16x32xf32> to vector<16xf32>
    %26 = vector.shape_cast %25 : vector<16xf32> to vector<16x1xf32>
    %cst_15 = arith.constant 3.200000e+01 : f32
    %27 = vector.broadcast %cst_15 : f32 to vector<16x1xf32>
    %28 = arith.divf %26, %27 : vector<16x1xf32>
    %29 = vector.broadcast %21 : vector<16x1xf32> to vector<16x32xf32>
    %30 = arith.subf %17, %29 : vector<16x32xf32>
    %cst_16 = arith.constant 9.99999974E-6 : f32
    %31 = vector.broadcast %cst_16 : f32 to vector<16x1xf32>
    %32 = arith.addf %28, %31 : vector<16x1xf32>
    %33 = math.rsqrt %32 : vector<16x1xf32>
    %34 = vector.broadcast %33 : vector<16x1xf32> to vector<16x32xf32>
    %35 = arith.mulf %30, %34 : vector<16x32xf32>
    %c0_17 = arith.constant 0 : index
    %c0_18 = arith.constant 0 : index
    %36 = vector.load %arg6[%c0_17, %c0_18] : memref<1x32xf32, #tpu.memory_space<vmem>>, vector<1x32xf32>
    %37 = vector.broadcast %36 : vector<1x32xf32> to vector<16x32xf32>
    %38 = arith.mulf %35, %37 : vector<16x32xf32>
    %c0_19 = arith.constant 0 : index
    %c0_20 = arith.constant 0 : index
    %39 = vector.load %arg7[%c0_19, %c0_20] : memref<1x32xf32, #tpu.memory_space<vmem>>, vector<1x32xf32>
    %40 = vector.broadcast %39 : vector<1x32xf32> to vector<16x32xf32>
    %41 = arith.addf %38, %40 : vector<16x32xf32>
    %42 = arith.truncf %41 : vector<16x32xf32> to vector<16x32xbf16>
    %c0_21 = arith.constant 0 : index
    %c0_22 = arith.constant 0 : index
    %43 = vector.load %arg8[%c0_21, %c0_22] : memref<16x32xbf16, #tpu.memory_space<vmem>>, vector<16x32xbf16>
    tpu.vector_store %arg8[%c0_21, %c0_22], %42 {strides = array<i32>} : memref<16x32xbf16, #tpu.memory_space<vmem>>, vector<16x32xbf16>,
    return
  }
  func.func @transform_0(%arg0: i32) -> (i32, i32) {
    %c0_i32 = arith.constant 0 : i32
    %c0_i32_0 = arith.constant 0 : i32
    return %arg0, %c0_i32 : i32, i32
  }
  func.func @transform_1(%arg0: i32) -> (i32, i32) {
    %c0_i32 = arith.constant 0 : i32
    %c0_i32_0 = arith.constant 0 : i32
    %c0_i32_1 = arith.constant 0 : i32
    return %c0_i32, %c0_i32_0 : i32, i32
  }
  func.func @transform_2(%arg0: i32) -> (i32, i32) {
    %c0_i32 = arith.constant 0 : i32
    %c0_i32_0 = arith.constant 0 : i32
    %c0_i32_1 = arith.constant 0 : i32
    return %c0_i32, %c0_i32_0 : i32, i32
  }
  func.func @transform_3(%arg0: i32) -> (i32, i32) {
    %c0_i32 = arith.constant 0 : i32
    %c0_i32_0 = arith.constant 0 : i32
    %c0_i32_1 = arith.constant 0 : i32
    return %c0_i32, %c0_i32_0 : i32, i32
  }
  func.func @transform_4(%arg0: i32) -> (i32, i32) {
    %c0_i32 = arith.constant 0 : i32
    %c0_i32_0 = arith.constant 0 : i32
    %c0_i32_1 = arith.constant 0 : i32
    return %c0_i32, %c0_i32_0 : i32, i32
  }
  func.func @transform_5(%arg0: i32) -> (i32, i32) {
    %c0_i32 = arith.constant 0 : i32
    %c0_i32_0 = arith.constant 0 : i32
    %c0_i32_1 = arith.constant 0 : i32
    return %c0_i32, %c0_i32_0 : i32, i32
  }
  func.func @transform_6(%arg0: i32) -> (i32, i32) {
    %c0_i32 = arith.constant 0 : i32
    %c0_i32_0 = arith.constant 0 : i32
    %c0_i32_1 = arith.constant 0 : i32
    return %c0_i32, %c0_i32_0 : i32, i32
  }
  func.func @transform_7(%arg0: i32) -> (i32, i32) {
    %c0_i32 = arith.constant 0 : i32
    %c0_i32_0 = arith.constant 0 : i32
    return %arg0, %c0_i32 : i32, i32
  }
}

module attributes {stable_mosaic.version = 11 : i64} {
  func.func @_attn_block_kernel(%arg0: i32, %arg1: memref<2xi32, #tpu.memory_space<smem>>, %arg2: memref<1x8x32xbf16, #tpu.memory_space<vmem>>, %arg3: memref<32x96xbf16, #tpu.memory_space<vmem>>, %arg4: memref<1x96xf32, #tpu.memory_space<vmem>>, %arg5: memref<32x32xbf16, #tpu.memory_space<vmem>>, %arg6: memref<1x32xf32, #tpu.memory_space<vmem>>, %arg7: memref<1x32xf32, #tpu.memory_space<vmem>>, %arg8: memref<1x32xf32, #tpu.memory_space<vmem>>, %arg9: memref<1x8x32xbf16, #tpu.memory_space<vmem>>, %arg10: memref<8x32xf32, #tpu.memory_space<vmem>>) attributes {dimension_semantics = [#tpu.dimension_semantics<parallel>], iteration_bounds = array<i64: 2>, scalar_prefetch = 1 : i64, scratch_operands = 1 : i64, tpu.core_type = #tpu.core_type<tc>, window_params = [{transform_indices = @transform_0, window_bounds = array<i64: 1, 8, 32>}, {pipeline_mode = #tpu.pipeline_mode<synchronous>, transform_indices = @transform_1, window_bounds = array<i64: 32, 96>}, {pipeline_mode = #tpu.pipeline_mode<synchronous>, transform_indices = @transform_2, window_bounds = array<i64: 1, 96>}, {pipeline_mode = #tpu.pipeline_mode<synchronous>, transform_indices = @transform_3, window_bounds = array<i64: 32, 32>}, {pipeline_mode = #tpu.pipeline_mode<synchronous>, transform_indices = @transform_4, window_bounds = array<i64: 1, 32>}, {pipeline_mode = #tpu.pipeline_mode<synchronous>, transform_indices = @transform_5, window_bounds = array<i64: 1, 32>}, {pipeline_mode = #tpu.pipeline_mode<synchronous>, transform_indices = @transform_6, window_bounds = array<i64: 1, 32>}, {transform_indices = @transform_7, window_bounds = array<i64: 1, 8, 32>}]} {
    %0 = arith.index_cast %arg0 : i32 to index
    %1 = memref.load %arg1[%0] : memref<2xi32, #tpu.memory_space<smem>>
    %c0 = arith.constant 0 : index
    %c0_0 = arith.constant 0 : index
    %c0_1 = arith.constant 0 : index
    %2 = vector.load %arg2[%c0, %c0_0, %c0_1] : memref<1x8x32xbf16, #tpu.memory_space<vmem>>, vector<1x8x32xbf16>
    %3 = vector.shape_cast %2 : vector<1x8x32xbf16> to vector<8x32xbf16>
    %c0_2 = arith.constant 0 : index
    %c0_3 = arith.constant 0 : index
    %4 = vector.load %arg3[%c0_2, %c0_3] : memref<32x96xbf16, #tpu.memory_space<vmem>>, vector<32x96xbf16>
    %cst = arith.constant dense<0.000000e+00> : vector<8x96xf32>
    %5 = tpu.matmul %3, %4, %cst {dimension_numbers = #tpu.dot_dimension_numbers<[1], [0], [0], [1], [0, 0, 1, 1], [], []>} : vector<8x32xbf16>, vector<32x96xbf16>, vector<8x96xf32> -> vector<8x96xf32>
    %c0_4 = arith.constant 0 : index
    %c0_5 = arith.constant 0 : index
    %6 = vector.load %arg4[%c0_4, %c0_5] : memref<1x96xf32, #tpu.memory_space<vmem>>, vector<1x96xf32>
    %7 = vector.broadcast %6 : vector<1x96xf32> to vector<8x96xf32>
    %8 = arith.addf %5, %7 : vector<8x96xf32>
    %9 = arith.truncf %8 : vector<8x96xf32> to vector<8x96xbf16>
    %10 = tpu.iota {dimensions = array<i32: 1>} : vector<1x8xi32>
    %11 = vector.broadcast %1 : i32 to vector<1x8xi32>
    %12 = arith.cmpi slt, %10, %11 : vector<1x8xi32>
    %cst_6 = arith.constant 0.000000e+00 : f32
    %cst_7 = arith.constant -1.000000e+06 : f32
    %13 = vector.broadcast %cst_6 : f32 to vector<1x8xf32>
    %14 = vector.broadcast %cst_7 : f32 to vector<1x8xf32>
    %15 = arith.select %12, %13, %14 : vector<1x8xi1>, vector<1x8xf32>
    %16 = vector.extract_strided_slice %9 {offsets = [0, 0], sizes = [8, 16], strides = [1, 1]} : vector<8x96xbf16> to vector<8x16xbf16>
    %17 = vector.extract_strided_slice %9 {offsets = [0, 32], sizes = [8, 16], strides = [1, 1]} : vector<8x96xbf16> to vector<8x16xbf16>
    %18 = vector.extract_strided_slice %9 {offsets = [0, 64], sizes = [8, 16], strides = [1, 1]} : vector<8x96xbf16> to vector<8x16xbf16>
    %cst_8 = arith.constant dense<0.000000e+00> : vector<8x8xf32>
    %19 = tpu.matmul %16, %17, %cst_8 {dimension_numbers = #tpu.dot_dimension_numbers<[1], [1], [0], [0], [0, 0, 1, 0], [], []>} : vector<8x16xbf16>, vector<8x16xbf16>, vector<8x8xf32> -> vector<8x8xf32>
    %20 = vector.broadcast %15 : vector<1x8xf32> to vector<8x8xf32>
    %21 = arith.addf %19, %20 : vector<8x8xf32>
    %cst_9 = arith.constant dense<0xFF800000> : vector<8xf32>
    %22 = vector.multi_reduction <maximumf>, %21, %cst_9 [1] : vector<8x8xf32> to vector<8xf32>
    %23 = vector.shape_cast %22 : vector<8xf32> to vector<8x1xf32>
    %24 = vector.broadcast %23 : vector<8x1xf32> to vector<8x8xf32>
    %25 = arith.subf %21, %24 : vector<8x8xf32>
    %26 = math.exp %25 : vector<8x8xf32>
    %cst_10 = arith.constant dense<0.000000e+00> : vector<8xf32>
    %27 = vector.multi_reduction <add>, %26, %cst_10 [1] : vector<8x8xf32> to vector<8xf32>
    %28 = vector.shape_cast %27 : vector<8xf32> to vector<8x1xf32>
    %29 = arith.truncf %26 : vector<8x8xf32> to vector<8x8xbf16>
    %cst_11 = arith.constant dense<0.000000e+00> : vector<8x16xf32>
    %30 = tpu.matmul %29, %18, %cst_11 {dimension_numbers = #tpu.dot_dimension_numbers<[1], [0], [0], [1], [0, 0, 1, 1], [], []>} : vector<8x8xbf16>, vector<8x16xbf16>, vector<8x16xf32> -> vector<8x16xf32>
    %31 = tpu.reciprocal %28 {approx = true} : vector<8x1xf32> -> vector<8x1xf32>
    %32 = vector.broadcast %31 : vector<8x1xf32> to vector<8x16xf32>
    %33 = arith.mulf %30, %32 : vector<8x16xf32>
    %c0_12 = arith.constant 0 : index
    %c0_13 = arith.constant 0 : index
    %34 = vector.load %arg10[%c0_12, %c0_13] : memref<8x32xf32, #tpu.memory_space<vmem>>, vector<8x16xf32>
    tpu.vector_store %arg10[%c0_12, %c0_13], %33 {strides = array<i32>} : memref<8x32xf32, #tpu.memory_space<vmem>>, vector<8x16xf32>,
    %35 = vector.extract_strided_slice %9 {offsets = [0, 16], sizes = [8, 16], strides = [1, 1]} : vector<8x96xbf16> to vector<8x16xbf16>
    %36 = vector.extract_strided_slice %9 {offsets = [0, 48], sizes = [8, 16], strides = [1, 1]} : vector<8x96xbf16> to vector<8x16xbf16>
    %37 = vector.extract_strided_slice %9 {offsets = [0, 80], sizes = [8, 16], strides = [1, 1]} : vector<8x96xbf16> to vector<8x16xbf16>
    %cst_14 = arith.constant dense<0.000000e+00> : vector<8x8xf32>
    %38 = tpu.matmul %35, %36, %cst_14 {dimension_numbers = #tpu.dot_dimension_numbers<[1], [1], [0], [0], [0, 0, 1, 0], [], []>} : vector<8x16xbf16>, vector<8x16xbf16>, vector<8x8xf32> -> vector<8x8xf32>
    %39 = vector.broadcast %15 : vector<1x8xf32> to vector<8x8xf32>
    %40 = arith.addf %38, %39 : vector<8x8xf32>
    %cst_15 = arith.constant dense<0xFF800000> : vector<8xf32>
    %41 = vector.multi_reduction <maximumf>, %40, %cst_15 [1] : vector<8x8xf32> to vector<8xf32>
    %42 = vector.shape_cast %41 : vector<8xf32> to vector<8x1xf32>
    %43 = vector.broadcast %42 : vector<8x1xf32> to vector<8x8xf32>
    %44 = arith.subf %40, %43 : vector<8x8xf32>
    %45 = math.exp %44 : vector<8x8xf32>
    %cst_16 = arith.constant dense<0.000000e+00> : vector<8xf32>
    %46 = vector.multi_reduction <add>, %45, %cst_16 [1] : vector<8x8xf32> to vector<8xf32>
    %47 = vector.shape_cast %46 : vector<8xf32> to vector<8x1xf32>
    %48 = arith.truncf %45 : vector<8x8xf32> to vector<8x8xbf16>
    %cst_17 = arith.constant dense<0.000000e+00> : vector<8x16xf32>
    %49 = tpu.matmul %48, %37, %cst_17 {dimension_numbers = #tpu.dot_dimension_numbers<[1], [0], [0], [1], [0, 0, 1, 1], [], []>} : vector<8x8xbf16>, vector<8x16xbf16>, vector<8x16xf32> -> vector<8x16xf32>
    %50 = tpu.reciprocal %47 {approx = true} : vector<8x1xf32> -> vector<8x1xf32>
    %51 = vector.broadcast %50 : vector<8x1xf32> to vector<8x16xf32>
    %52 = arith.mulf %49, %51 : vector<8x16xf32>
    %c0_18 = arith.constant 0 : index
    %c16 = arith.constant 16 : index
    %53 = vector.load %arg10[%c0_18, %c16] : memref<8x32xf32, #tpu.memory_space<vmem>>, vector<8x16xf32>
    tpu.vector_store %arg10[%c0_18, %c16], %52 {strides = array<i32>} : memref<8x32xf32, #tpu.memory_space<vmem>>, vector<8x16xf32>,
    %c0_19 = arith.constant 0 : index
    %c0_20 = arith.constant 0 : index
    %54 = vector.load %arg10[%c0_19, %c0_20] : memref<8x32xf32, #tpu.memory_space<vmem>>, vector<8x32xf32>
    %55 = arith.truncf %54 : vector<8x32xf32> to vector<8x32xbf16>
    %c0_21 = arith.constant 0 : index
    %c0_22 = arith.constant 0 : index
    %56 = vector.load %arg5[%c0_21, %c0_22] : memref<32x32xbf16, #tpu.memory_space<vmem>>, vector<32x32xbf16>
    %cst_23 = arith.constant dense<0.000000e+00> : vector<8x32xf32>
    %57 = tpu.matmul %55, %56, %cst_23 {dimension_numbers = #tpu.dot_dimension_numbers<[1], [0], [0], [1], [0, 0, 1, 1], [], []>} : vector<8x32xbf16>, vector<32x32xbf16>, vector<8x32xf32> -> vector<8x32xf32>
    %c0_24 = arith.constant 0 : index
    %c0_25 = arith.constant 0 : index
    %58 = vector.load %arg6[%c0_24, %c0_25] : memref<1x32xf32, #tpu.memory_space<vmem>>, vector<1x32xf32>
    %59 = vector.broadcast %58 : vector<1x32xf32> to vector<8x32xf32>
    %60 = arith.addf %57, %59 : vector<8x32xf32>
    %61 = arith.extf %3 : vector<8x32xbf16> to vector<8x32xf32>
    %62 = arith.addf %61, %60 : vector<8x32xf32>
    %cst_26 = arith.constant dense<0.000000e+00> : vector<8xf32>
    %63 = vector.multi_reduction <add>, %62, %cst_26 [1] : vector<8x32xf32> to vector<8xf32>
    %64 = vector.shape_cast %63 : vector<8xf32> to vector<8x1xf32>
    %cst_27 = arith.constant 3.200000e+01 : f32
    %65 = vector.broadcast %cst_27 : f32 to vector<8x1xf32>
    %66 = arith.divf %64, %65 : vector<8x1xf32>
    %67 = vector.broadcast %66 : vector<8x1xf32> to vector<8x32xf32>
    %68 = arith.subf %62, %67 : vector<8x32xf32>
    %69 = arith.mulf %68, %68 : vector<8x32xf32>
    %cst_28 = arith.constant dense<0.000000e+00> : vector<8xf32>
    %70 = vector.multi_reduction <add>, %69, %cst_28 [1] : vector<8x32xf32> to vector<8xf32>
    %71 = vector.shape_cast %70 : vector<8xf32> to vector<8x1xf32>
    %cst_29 = arith.constant 3.200000e+01 : f32
    %72 = vector.broadcast %cst_29 : f32 to vector<8x1xf32>
    %73 = arith.divf %71, %72 : vector<8x1xf32>
    %74 = vector.broadcast %66 : vector<8x1xf32> to vector<8x32xf32>
    %75 = arith.subf %62, %74 : vector<8x32xf32>
    %cst_30 = arith.constant 9.99999974E-6 : f32
    %76 = vector.broadcast %cst_30 : f32 to vector<8x1xf32>
    %77 = arith.addf %73, %76 : vector<8x1xf32>
    %78 = math.rsqrt %77 : vector<8x1xf32>
    %79 = vector.broadcast %78 : vector<8x1xf32> to vector<8x32xf32>
    %80 = arith.mulf %75, %79 : vector<8x32xf32>
    %c0_31 = arith.constant 0 : index
    %c0_32 = arith.constant 0 : index
    %81 = vector.load %arg7[%c0_31, %c0_32] : memref<1x32xf32, #tpu.memory_space<vmem>>, vector<1x32xf32>
    %82 = vector.broadcast %81 : vector<1x32xf32> to vector<8x32xf32>
    %83 = arith.mulf %80, %82 : vector<8x32xf32>
    %c0_33 = arith.constant 0 : index
    %c0_34 = arith.constant 0 : index
    %84 = vector.load %arg8[%c0_33, %c0_34] : memref<1x32xf32, #tpu.memory_space<vmem>>, vector<1x32xf32>
    %85 = vector.broadcast %84 : vector<1x32xf32> to vector<8x32xf32>
    %86 = arith.addf %83, %85 : vector<8x32xf32>
    %87 = arith.truncf %86 : vector<8x32xf32> to vector<8x32xbf16>
    %c0_35 = arith.constant 0 : index
    %c0_36 = arith.constant 0 : index
    %c0_37 = arith.constant 0 : index
    %88 = vector.load %arg9[%c0_35, %c0_36, %c0_37] : memref<1x8x32xbf16, #tpu.memory_space<vmem>>, vector<1x8x32xbf16>
    %89 = vector.shape_cast %88 : vector<1x8x32xbf16> to vector<8x32xbf16>
    %90 = vector.shape_cast %87 : vector<8x32xbf16> to vector<1x8x32xbf16>
    tpu.vector_store %arg9[%c0_35, %c0_36, %c0_37], %90 {strides = array<i32>} : memref<1x8x32xbf16, #tpu.memory_space<vmem>>, vector<1x8x32xbf16>,
    return
  }
  func.func @transform_0(%arg0: i32, %arg1: memref<2xi32, #tpu.memory_space<smem>>) -> (i32, i32, i32) {
    %c0_i32 = arith.constant 0 : i32
    %c0_i32_0 = arith.constant 0 : i32
    %c0_i32_1 = arith.constant 0 : i32
    return %arg0, %c0_i32, %c0_i32_0 : i32, i32, i32
  }
  func.func @transform_1(%arg0: i32, %arg1: memref<2xi32, #tpu.memory_space<smem>>) -> (i32, i32) {
    %c0_i32 = arith.constant 0 : i32
    %c0_i32_0 = arith.constant 0 : i32
    %c0_i32_1 = arith.constant 0 : i32
    return %c0_i32, %c0_i32_0 : i32, i32
  }
  func.func @transform_2(%arg0: i32, %arg1: memref<2xi32, #tpu.memory_space<smem>>) -> (i32, i32) {
    %c0_i32 = arith.constant 0 : i32
    %c0_i32_0 = arith.constant 0 : i32
    %c0_i32_1 = arith.constant 0 : i32
    return %c0_i32, %c0_i32_0 : i32, i32
  }
  func.func @transform_3(%arg0: i32, %arg1: memref<2xi32, #tpu.memory_space<smem>>) -> (i32, i32) {
    %c0_i32 = arith.constant 0 : i32
    %c0_i32_0 = arith.constant 0 : i32
    %c0_i32_1 = arith.constant 0 : i32
    return %c0_i32, %c0_i32_0 : i32, i32
  }
  func.func @transform_4(%arg0: i32, %arg1: memref<2xi32, #tpu.memory_space<smem>>) -> (i32, i32) {
    %c0_i32 = arith.constant 0 : i32
    %c0_i32_0 = arith.constant 0 : i32
    %c0_i32_1 = arith.constant 0 : i32
    return %c0_i32, %c0_i32_0 : i32, i32
  }
  func.func @transform_5(%arg0: i32, %arg1: memref<2xi32, #tpu.memory_space<smem>>) -> (i32, i32) {
    %c0_i32 = arith.constant 0 : i32
    %c0_i32_0 = arith.constant 0 : i32
    %c0_i32_1 = arith.constant 0 : i32
    return %c0_i32, %c0_i32_0 : i32, i32
  }
  func.func @transform_6(%arg0: i32, %arg1: memref<2xi32, #tpu.memory_space<smem>>) -> (i32, i32) {
    %c0_i32 = arith.constant 0 : i32
    %c0_i32_0 = arith.constant 0 : i32
    %c0_i32_1 = arith.constant 0 : i32
    return %c0_i32, %c0_i32_0 : i32, i32
  }
  func.func @transform_7(%arg0: i32, %arg1: memref<2xi32, #tpu.memory_space<smem>>) -> (i32, i32, i32) {
    %c0_i32 = arith.constant 0 : i32
    %c0_i32_0 = arith.constant 0 : i32
    %c0_i32_1 = arith.constant 0 : i32
    return %arg0, %c0_i32, %c0_i32_0 : i32, i32, i32
  }
}

</mosaic_0001>

<llo_original>
// kernel: tpu_custom_call.1
$region0: #{tpu_custom_call.1}
  #allocation0 [shape = 'u32[]', space=smem, size = 0x4, offset = 0x4, fixed_abs, tag = 'smem constant byte address 0x4 - core index']
  #allocation1 [shape = 'u32[72,128]{1,0:T(1,128)}', space=vmem, size = 0x9000, scoped, tag = 'internal scratch']
  %s0 = inlined_call_operand.hbm [shape: f32[8,128], index: 0, kind: input, shape index: {}]
  %s1 = inlined_call_operand.hbm [shape: f32[8,128], index: 1, kind: output, shape index: {}]
  %s2 = sld [smem:[#allocation0]]
  $region18: #{tpu_custom_call.1} parent=0
    _
  %s4 = ssub.s32 1, %s2
  %s5 = scalar_select 0, %s4, %s2
  $region1: #{tpu_custom_call.1} parent=0
    #allocation2 [shape = 'u8[4096]{0}', space=vmem, size = 0x1000, scoped, tag = 'input window, operand 0, single buffered']
    #allocation3 [shape = 's32[1]{0}', space=sflag, size = 0x4, scoped, tag = 'scoped memory for tpu_custom_call.1']
    #allocation4 [shape = 's32[1]{0}', space=sflag, size = 0x4, scoped, tag = 'scoped memory for tpu_custom_call.1']
    #allocation5 [shape = 'u8[4096]{0}', space=vmem, size = 0x1000, scoped, tag = 'output window, operand 0, single buffered']
    %6 = vsyncpa [#allocation3], 0
    %7 = vsyncpa [#allocation4], 0
    // Predicated region
    $region2: #{tpu_custom_call.1} parent=1 // pred_check
      _
    $region3: #{tpu_custom_call.1} parent=1 // pred_check_branch
      %9 = sbr.rel (0) target = $region5
    $region4: #{tpu_custom_call.1} parent=1 // pred_region
      %11 = vsyncadd [#allocation3], 0
      %s13 = sshll.u32 %s0, 4
      %s14 = int_to_ptr.hbm [resolvable:$true] %s13
      %s15 = sshll.u32 [#allocation2], 4
      %s16 = int_to_ptr.vmem [resolvable:$true] %s15
      %18 = dma.hbm_to_vmem [thread:$0]  %s14, 128, %s16, [#allocation3]
    $region5: #{tpu_custom_call.1} parent=1 // pred_fallthru
      _
    // Predicated region
    $region6: #{tpu_custom_call.1} parent=1 // pred_check
      _
    $region7: #{tpu_custom_call.1} parent=1 // pred_check_branch
      %20 = sbr.rel (0) target = $region9
    $region8: #{tpu_custom_call.1} parent=1 // pred_region
      %22 = dma.done [#allocation3], 128
    $region9: #{tpu_custom_call.1} parent=1 // pred_fallthru
      _
    %v23 = vld [vmem:[#allocation2] sm:$0xff]
    %24 = vst [vmem:[#allocation5] sm:$0xff] %v23
    // Predicated region
    $region10: #{tpu_custom_call.1} parent=1 // pred_check
      _
    $region11: #{tpu_custom_call.1} parent=1 // pred_check_branch
      %26 = sbr.rel (0) target = $region13
    $region12: #{tpu_custom_call.1} parent=1 // pred_region
      %28 = vsyncadd [#allocation4], 0
      %s30 = sshll.u32 [#allocation5], 4
      %s31 = int_to_ptr.vmem [resolvable:$true] %s30
      %s32 = sshll.u32 %s1, 4
      %s33 = int_to_ptr.hbm [resolvable:$true] %s32
      %35 = dma.vmem_to_hbm [thread:$0]  %s31, 128, %s33, [#allocation4]
    $region13: #{tpu_custom_call.1} parent=1 // pred_fallthru
      _
    // Predicated region
    $region14: #{tpu_custom_call.1} parent=1 // pred_check
      _
    $region15: #{tpu_custom_call.1} parent=1 // pred_check_branch
      %37 = sbr.rel (0) target = $region17
    $region16: #{tpu_custom_call.1} parent=1 // pred_region
      %39 = dma.done [#allocation4], 128
    $region17: #{tpu_custom_call.1} parent=1 // pred_fallthru
      _
    %40 = vsyncpa [#allocation3], 1
    %41 = vsyncpa [#allocation4], 1

// kernel: bert_text_tagging_forward.5
$region0: #{bert_text_tagging_forward.5}
  #allocation0 [shape = 'u32[]', space=smem, size = 0x4, offset = 0x4, fixed_abs, tag = 'smem constant byte address 0x4 - core index']
  #allocation1 [shape = 'u32[72,128]{1,0:T(1,128)}', space=vmem, size = 0x9000, scoped, tag = 'internal scratch']
  %s0 = inlined_call_operand.vmem [shape: bf16[16,32], index: 0, kind: input, shape index: {}]
  %s1 = inlined_call_operand.vmem [shape: bf16[32,64], index: 1, kind: input, shape index: {}]
  %s2 = inlined_call_operand.vmem [shape: f32[1,64], index: 2, kind: input, shape index: {}]
  %s3 = inlined_call_operand.vmem [shape: bf16[64,32], index: 3, kind: input, shape index: {}]
  %s4 = inlined_call_operand.vmem [shape: f32[1,32], index: 4, kind: input, shape index: {}]
  %s5 = inlined_call_operand.vmem [shape: f32[1,32], index: 5, kind: input, shape index: {}]
  %s6 = inlined_call_operand.vmem [shape: f32[1,32], index: 6, kind: input, shape index: {}]
  %s7 = inlined_call_operand.vmem [shape: bf16[16,32], index: 7, kind: output, shape index: {}]
  %s8 = sld [smem:[#allocation0]]
  $region38: #{bert_text_tagging_forward.5} parent=0
    _
  %s10 = ssub.s32 1, %s8
  %s11 = scalar_select 0, %s10, %s8
  // Predicated region
  $region2: #{bert_text_tagging_forward.5} parent=0 // pred_check
    _
  $region3: #{bert_text_tagging_forward.5} parent=0 // pred_check_branch
    %13 = sbr.rel (0) target = $region5
  $region4: #{bert_text_tagging_forward.5} parent=0 // pred_region
    _
  $region5: #{bert_text_tagging_forward.5} parent=0 // pred_fallthru
    _
  // Predicated region
  $region6: #{bert_text_tagging_forward.5} parent=0 // pred_check
    _
  $region7: #{bert_text_tagging_forward.5} parent=0 // pred_check_branch
    %15 = sbr.rel (0) target = $region9
  $region8: #{bert_text_tagging_forward.5} parent=0 // pred_region
    _
  $region9: #{bert_text_tagging_forward.5} parent=0 // pred_fallthru
    _
  // Predicated region
  $region10: #{bert_text_tagging_forward.5} parent=0 // pred_check
    _
  $region11: #{bert_text_tagging_forward.5} parent=0 // pred_check_branch
    %17 = sbr.rel (0) target = $region13
  $region12: #{bert_text_tagging_forward.5} parent=0 // pred_region
    _
  $region13: #{bert_text_tagging_forward.5} parent=0 // pred_fallthru
    _
  // Predicated region
  $region14: #{bert_text_tagging_forward.5} parent=0 // pred_check
    _
  $region15: #{bert_text_tagging_forward.5} parent=0 // pred_check_branch
    %19 = sbr.rel (0) target = $region17
  $region16: #{bert_text_tagging_forward.5} parent=0 // pred_region
    _
  $region17: #{bert_text_tagging_forward.5} parent=0 // pred_fallthru
    _
  // Predicated region
  $region18: #{bert_text_tagging_forward.5} parent=0 // pred_check
    _
  $region19: #{bert_text_tagging_forward.5} parent=0 // pred_check_branch
    %21 = sbr.rel (0) target = $region21
  $region20: #{bert_text_tagging_forward.5} parent=0 // pred_region
    _
  $region21: #{bert_text_tagging_forward.5} parent=0 // pred_fallthru
    _
  // Predicated region
  $region22: #{bert_text_tagging_forward.5} parent=0 // pred_check
    _
  $region23: #{bert_text_tagging_forward.5} parent=0 // pred_check_branch
    %23 = sbr.rel (0) target = $region25
  $region24: #{bert_text_tagging_forward.5} parent=0 // pred_region
    _
  $region25: #{bert_text_tagging_forward.5} parent=0 // pred_fallthru
    _
  // Predicated region
  $region26: #{bert_text_tagging_forward.5} parent=0 // pred_check
    _
  $region27: #{bert_text_tagging_forward.5} parent=0 // pred_check_branch
    %25 = sbr.rel (0) target = $region29
  $region28: #{bert_text_tagging_forward.5} parent=0 // pred_region
    _
  $region29: #{bert_text_tagging_forward.5} parent=0 // pred_fallthru
    _
  %v27 = vld [vmem:[%s0] sm:$0xf]
  %v28 = vld [vmem:[%s0 + $0x4] sm:$0xf]
  %v29 = vld [vmem:[%s1] sm:$0xf]
  %v30 = vld [vmem:[%s1 + $0x4] sm:$0xf]
  %v31 = vld [vmem:[%s1 + $0x8] sm:$0xf]
  %v32 = vld [vmem:[%s1 + $0xc] sm:$0xf]
  %v33 = vld [vmem:[%s2] sm:$0x1]
  %v35 = vperm.slane %v33, 0
  %v39 = vunpack.c.l.b16 %v27
  %v40 = vunpack.c.l.b16 %v28
  %v41 = vpack.c.b16 %v40, %v39
  %v46 = vunpack.c.l.b16 %v29
  %v47 = vunpack.c.l.b16 %v30
  %v48 = vunpack.c.l.b16 %v31
  %v49 = vunpack.c.l.b16 %v32
  %v50 = vpack.c.b16 %v47, %v46
  %v51 = vpack.c.b16 %v49, %v48
  %vm54 = vcmask 261120
  %v56 = vsel %vm54, %v41, 0
  %58 = vmatpush.bf16.msra.mxu0 0
  %59 = vmatpush.bf16.msra.mxu0 0
  %60 = vmatpush.bf16.msra.mxu0 0
  %61 = vmatpush.bf16.msra.mxu0 0
  %62 = vmatpush.bf16.msra.mxu0 0
  %63 = vmatpush.bf16.msra.mxu0 0
  %64 = vmatpush.bf16.msra.mxu0 %v51
  %65 = vmatpush.bf16.msra.mxu0 %v50
  %66 = vmatmul.bf16.gmra.mxu0 %v56
  %v67 = vpop.f32.mrf.mxu0
  %v68 = vadd.f32 %v35, %v67
  %v69 = vpop.f32.mrf.mxu0
  %v70 = vadd.f32 %v35, %v69
  %71 = vdwg.mxu0
  %v72 = vmax.f32 %v68, 0.0
  %v73 = vmax.f32 %v70, 0.0
  %v74 = vpack.c.bf16 %v73, %v72
  %v75 = vld [vmem:[%s3] sm:$0xf]
  %v76 = vld [vmem:[%s3 + $0x4] sm:$0xf]
  %v77 = vld [vmem:[%s3 + $0x8] sm:$0xf]
  %v78 = vld [vmem:[%s3 + $0xc] sm:$0xf]
  %v79 = vld [vmem:[%s3 + $0x10] sm:$0xf]
  %v80 = vld [vmem:[%s3 + $0x14] sm:$0xf]
  %v81 = vld [vmem:[%s3 + $0x18] sm:$0xf]
  %v82 = vld [vmem:[%s3 + $0x1c] sm:$0xf]
  %v91 = vunpack.c.l.b16 %v75
  %v92 = vunpack.c.l.b16 %v76
  %v93 = vunpack.c.l.b16 %v77
  %v94 = vunpack.c.l.b16 %v78
  %v95 = vunpack.c.l.b16 %v79
  %v96 = vunpack.c.l.b16 %v80
  %v97 = vunpack.c.l.b16 %v81
  %v98 = vunpack.c.l.b16 %v82
  %v99 = vpack.c.b16 %v92, %v91
  %v100 = vpack.c.b16 %v94, %v93
  %v101 = vpack.c.b16 %v96, %v95
  %v102 = vpack.c.b16 %v98, %v97
  %vm107 = vcmask 523264
  %v109 = vsel %vm107, %v74, 0
  %111 = vmatpush.bf16.msra.mxu0 0
  %112 = vmatpush.bf16.msra.mxu0 0
  %113 = vmatpush.bf16.msra.mxu0 0
  %114 = vmatpush.bf16.msra.mxu0 0
  %115 = vmatpush.bf16.msra.mxu0 %v102
  %116 = vmatpush.bf16.msra.mxu0 %v101
  %117 = vmatpush.bf16.msra.mxu0 %v100
  %118 = vmatpush.bf16.msra.mxu0 %v99
  %119 = vmatmul.bf16.gmra.mxu0 %v109
  %v120 = vpop.f32.mrf.mxu0
  %v121 = vadd.f32 0.0, %v120
  %v122 = vpop.f32.mrf.mxu0
  %v123 = vadd.f32 0.0, %v122
  %124 = vdwg.mxu0
  %v125 = vunpack.c.l.bf16 %v27
  %v126 = vunpack.c.l.bf16 %v28
  %v127 = vadd.f32 %v125, %v121
  %v128 = vadd.f32 %v126, %v123
  %v129 = vld [vmem:[%s4] sm:$0x1]
  %v131 = vperm.slane %v129, 0
  %v133 = vadd.f32 %v127, %v131
  %v134 = vadd.f32 %v128, %v131
  %v135 = vsel %vm54, %v133, 0.0
  %136 = vadd.xlane.f32.xlu0 %v135
  %v137 = vpop.xlane.xlu0 %136
  %v138 = vsel %vm54, %v134, 0.0
  %139 = vadd.xlane.f32.xlu0 %v138
  %v140 = vpop.xlane.xlu0 %139
  %v141 = vrcp.pop 32.0
  %v142 = vmul.f32 32.0, %v141
  %v143 = vsub.f32 1.0, %v142
  %v144 = vmul.f32 %v141, %v143
  %v145 = vadd.f32 %v141, %v144
  %vm146 = vweird.f32 %v141
  %v147 = vsel %vm146, %v141, %v145
  %v148 = vmul.f32 %v137, %v147
  %v149 = vmul.f32 %v140, %v147
  %v150 = vsub.f32 %v133, %v148
  %v151 = vsub.f32 %v134, %v149
  %v152 = vmul.f32 %v150, %v150
  %v153 = vmul.f32 %v151, %v151
  %v154 = vsel %vm54, %v152, 0.0
  %155 = vadd.xlane.f32.xlu0 %v154
  %v156 = vpop.xlane.xlu0 %155
  %v157 = vsel %vm54, %v153, 0.0
  %158 = vadd.xlane.f32.xlu0 %v157
  %v159 = vpop.xlane.xlu0 %158
  %v160 = vmul.f32 %v156, %v147
  %v161 = vmul.f32 %v159, %v147
  %v162 = vadd.f32 %v160, 1e-05
  %v163 = vadd.f32 %v161, 1e-05
  %v164 = vrsqrt.pop %v162
  %v165 = vmul.f32 %v164, %v162
  %v166 = vmul.f32 %v165, %v164
  %v167 = vmul.f32 0.5, %v166
  %v168 = vsub.f32 1.5, %v167
  %v169 = vmul.f32 %v164, %v168
  %vm170 = vweird.f32 %v162
  %vm171 = vweird.f32 %v164
  %vm172 = vmor %vm170, %vm171
  %v173 = vsel %vm172, %v164, %v169
  %v174 = vrsqrt.pop %v163
  %v175 = vmul.f32 %v174, %v163
  %v176 = vmul.f32 %v175, %v174
  %v177 = vmul.f32 0.5, %v176
  %v178 = vsub.f32 1.5, %v177
  %v179 = vmul.f32 %v174, %v178
  %vm180 = vweird.f32 %v163
  %vm181 = vweird.f32 %v174
  %vm182 = vmor %vm180, %vm181
  %v183 = vsel %vm182, %v174, %v179
  %v184 = vmul.f32 %v150, %v173
  %v185 = vmul.f32 %v151, %v183
  %v186 = vld [vmem:[%s5] sm:$0x1]
  %v188 = vperm.slane %v186, 0
  %v190 = vmul.f32 %v184, %v188
  %v191 = vmul.f32 %v185, %v188
  %v192 = vld [vmem:[%s6] sm:$0x1]
  %v194 = vperm.slane %v192, 0
  %v196 = vadd.f32 %v190, %v194
  %v197 = vadd.f32 %v191, %v194
  %v198 = vpack.c.bf16 %v196, %v196
  %v199 = vpack.c.bf16 %v197, %v197
  %vm200 = vcmask 257024
  %201 = vst.msk [vmem:[%s7] sm:$0xf] %vm200, %v198
  %202 = vst.msk [vmem:[%s7 + $0x4] sm:$0xf] %vm200, %v199
  // Predicated region
  $region30: #{bert_text_tagging_forward.5} parent=0 // pred_check
    _
  $region31: #{bert_text_tagging_forward.5} parent=0 // pred_check_branch
    %204 = sbr.rel (0) target = $region33
  $region32: #{bert_text_tagging_forward.5} parent=0 // pred_region
    _
  $region33: #{bert_text_tagging_forward.5} parent=0 // pred_fallthru
    _
  // Predicated region
  $region34: #{bert_text_tagging_forward.5} parent=0 // pred_check
    _
  $region35: #{bert_text_tagging_forward.5} parent=0 // pred_check_branch
    %206 = sbr.rel (0) target = $region37
  $region36: #{bert_text_tagging_forward.5} parent=0 // pred_region
    _
  $region37: #{bert_text_tagging_forward.5} parent=0 // pred_fallthru
    _

// kernel: bert_text_tagging_forward.4
$region0: #{bert_text_tagging_forward.4}
  #allocation0 [shape = 'u32[]', space=smem, size = 0x4, offset = 0x4, fixed_abs, tag = 'smem constant byte address 0x4 - core index']
  #allocation1 [shape = 'u32[72,128]{1,0:T(1,128)}', space=vmem, size = 0x9000, scoped, tag = 'internal scratch']
  #allocation2 [shape = 'f32[8,32]{1,0:T(8,128)}', space=vmem, size = 0x1000, scoped, tag = 'scratch operand']
  #allocation3 [shape = 's32[1]{0}', space=sflag, size = 0x4, scoped, tag = 'scoped memory for bert_text_tagging_forward.4']
  #allocation4 [shape = 'u8[512]{0}', space=smem, size = 0x200, scoped, tag = 'prefetched SMEM operand 0']
  %s0 = inlined_call_operand.vmem [shape: s32[2], index: 0, kind: input, shape index: {}]
  %s1 = inlined_call_operand.vmem [shape: bf16[2,8,32], index: 1, kind: input, shape index: {}]
  %s2 = inlined_call_operand.vmem [shape: bf16[32,96], index: 2, kind: input, shape index: {}]
  %s3 = inlined_call_operand.vmem [shape: f32[1,96], index: 3, kind: input, shape index: {}]
  %s4 = inlined_call_operand.vmem [shape: bf16[32,32], index: 4, kind: input, shape index: {}]
  %s5 = inlined_call_operand.vmem [shape: f32[1,32], index: 5, kind: input, shape index: {}]
  %s6 = inlined_call_operand.vmem [shape: f32[1,32], index: 6, kind: input, shape index: {}]
  %s7 = inlined_call_operand.vmem [shape: f32[1,32], index: 7, kind: input, shape index: {}]
  %s8 = inlined_call_operand.vmem [shape: bf16[2,8,32], index: 8, kind: output, shape index: {}]
  %s9 = sld [smem:[#allocation0]]
  $region61: #{bert_text_tagging_forward.4} parent=0
    _
  %s11 = ssub.s32 1, %s9
  %s12 = scalar_select 0, %s11, %s9
  %s14 = sshll.u32 %s0, 4
  %s15 = int_to_ptr.vmem [resolvable:$true] %s14
  %17 = dma.vmem_to_smem %s15, 16, [#allocation4], [#allocation3]
  %19 = dma.done [#allocation3], 16
  %20 = sfence
  loop: start=0, step=1, limit=4
  $region2: #{bert_text_tagging_forward.4} parent=0 // loop_pre_header
    _
  $region3: #{bert_text_tagging_forward.4} parent=0 // loop_header
    %s22 = sphi 0, %s26
    %p23 = scmp.ge.s32.totalorder %s22, 4
    %s32 = sphi 0, %s34
    %s35 = sphi 0, %s32
    %s36 = sphi 0, %s35
    %s52 = sphi 0, %s36
    %s56 = sphi 0, %s56
    %s58 = sphi 0, %s56
    %s59 = sphi 0, %s58
    %s73 = sphi 0, %s59
    %s77 = sphi 0, %s77
    %s79 = sphi 0, %s77
    %s80 = sphi 0, %s79
    %s94 = sphi 0, %s80
    %s98 = sphi 0, %s98
    %s100 = sphi 0, %s98
    %s101 = sphi 0, %s100
    %s115 = sphi 0, %s101
    %s119 = sphi 0, %s119
    %s121 = sphi 0, %s119
    %s122 = sphi 0, %s121
    %s136 = sphi 0, %s122
    %s140 = sphi 0, %s140
    %s142 = sphi 0, %s140
    %s143 = sphi 0, %s142
    %s157 = sphi 0, %s143
    %s161 = sphi 0, %s161
    %s163 = sphi 0, %s161
    %s164 = sphi 0, %s163
    %s178 = sphi 0, %s164
    %s184 = sphi 0, %s186
    %s187 = sphi 0, %s184
    %s188 = sphi 0, %s187
    %s204 = sphi 0, %s188
  $region4: #{bert_text_tagging_forward.4} parent=0 // loop_header_branch
    %25 = sbr.rel (%p23) target = $region8
  $region5: #{bert_text_tagging_forward.4} parent=0 // loop_body
    %s27 = ssub.s32 %s22, 1
    %s28 = ssub.s32 %s22, 2
    %s29 = sadd.s32 %s22, 1
    %s30 = ssub.s32 %s22, %s29
    %p31 = scmp.eq.s32.totalorder %s30, 0
    %s33 = sadd.s32 %s32, 1
    %s34 = scalar_select %p31, %s32, %s33
    %p37 = pneg %p31
    %p38 = scmp.eq.s32.totalorder %s22, 1
    %p39 = por %p37, %p38
    %p40 = scmp.ne.s32.totalorder %s32, %s35
    %p41 = scmp.eq.s32.totalorder %s22, 0
    %p42 = por %p40, %p41
    %p43 = scmp.ne.s32.totalorder %s32, %s35
    %p44 = scmp.eq.s32.totalorder %s27, 1
    %p45 = por %p43, %p44
    %p46 = scmp.ne.s32.totalorder %s35, %s36
    %p47 = scmp.eq.s32.totalorder %s27, 0
    %p48 = por %p46, %p47
    %p49 = scmp.ne.s32.totalorder %s35, %s36
    %p50 = scmp.eq.s32.totalorder %s28, 1
    %p51 = por %p49, %p50
    %p53 = scmp.ne.s32.totalorder %s36, %s52
    %p54 = scmp.eq.s32.totalorder %s28, 0
    %p55 = por %p53, %p54
    %s57 = sadd.s32 %s56, 1
    %p60 = scmp.eq.s32.totalorder %s22, 1
    %p61 = scmp.ne.s32.totalorder %s56, %s58
    %p62 = scmp.eq.s32.totalorder %s22, 0
    %p63 = por %p61, %p62
    %p64 = scmp.ne.s32.totalorder %s56, %s58
    %p65 = scmp.eq.s32.totalorder %s27, 1
    %p66 = por %p64, %p65
    %p67 = scmp.ne.s32.totalorder %s58, %s59
    %p68 = scmp.eq.s32.totalorder %s27, 0
    %p69 = por %p67, %p68
    %p70 = scmp.ne.s32.totalorder %s58, %s59
    %p71 = scmp.eq.s32.totalorder %s28, 1
    %p72 = por %p70, %p71
    %p74 = scmp.ne.s32.totalorder %s59, %s73
    %p75 = scmp.eq.s32.totalorder %s28, 0
    %p76 = por %p74, %p75
    %s78 = sadd.s32 %s77, 1
    %p81 = scmp.eq.s32.totalorder %s22, 1
    %p82 = scmp.ne.s32.totalorder %s77, %s79
    %p83 = scmp.eq.s32.totalorder %s22, 0
    %p84 = por %p82, %p83
    %p85 = scmp.ne.s32.totalorder %s77, %s79
    %p86 = scmp.eq.s32.totalorder %s27, 1
    %p87 = por %p85, %p86
    %p88 = scmp.ne.s32.totalorder %s79, %s80
    %p89 = scmp.eq.s32.totalorder %s27, 0
    %p90 = por %p88, %p89
    %p91 = scmp.ne.s32.totalorder %s79, %s80
    %p92 = scmp.eq.s32.totalorder %s28, 1
    %p93 = por %p91, %p92
    %p95 = scmp.ne.s32.totalorder %s80, %s94
    %p96 = scmp.eq.s32.totalorder %s28, 0
    %p97 = por %p95, %p96
    %s99 = sadd.s32 %s98, 1
    %p102 = scmp.eq.s32.totalorder %s22, 1
    %p103 = scmp.ne.s32.totalorder %s98, %s100
    %p104 = scmp.eq.s32.totalorder %s22, 0
    %p105 = por %p103, %p104
    %p106 = scmp.ne.s32.totalorder %s98, %s100
    %p107 = scmp.eq.s32.totalorder %s27, 1
    %p108 = por %p106, %p107
    %p109 = scmp.ne.s32.totalorder %s100, %s101
    %p110 = scmp.eq.s32.totalorder %s27, 0
    %p111 = por %p109, %p110
    %p112 = scmp.ne.s32.totalorder %s100, %s101
    %p113 = scmp.eq.s32.totalorder %s28, 1
    %p114 = por %p112, %p113
    %p116 = scmp.ne.s32.totalorder %s101, %s115
    %p117 = scmp.eq.s32.totalorder %s28, 0
    %p118 = por %p116, %p117
    %s120 = sadd.s32 %s119, 1
    %p123 = scmp.eq.s32.totalorder %s22, 1
    %p124 = scmp.ne.s32.totalorder %s119, %s121
    %p125 = scmp.eq.s32.totalorder %s22, 0
    %p126 = por %p124, %p125
    %p127 = scmp.ne.s32.totalorder %s119, %s121
    %p128 = scmp.eq.s32.totalorder %s27, 1
    %p129 = por %p127, %p128
    %p130 = scmp.ne.s32.totalorder %s121, %s122
    %p131 = scmp.eq.s32.totalorder %s27, 0
    %p132 = por %p130, %p131
    %p133 = scmp.ne.s32.totalorder %s121, %s122
    %p134 = scmp.eq.s32.totalorder %s28, 1
    %p135 = por %p133, %p134
    %p137 = scmp.ne.s32.totalorder %s122, %s136
    %p138 = scmp.eq.s32.totalorder %s28, 0
    %p139 = por %p137, %p138
    %s141 = sadd.s32 %s140, 1
    %p144 = scmp.eq.s32.totalorder %s22, 1
    %p145 = scmp.ne.s32.totalorder %s140, %s142
    %p146 = scmp.eq.s32.totalorder %s22, 0
    %p147 = por %p145, %p146
    %p148 = scmp.ne.s32.totalorder %s140, %s142
    %p149 = scmp.eq.s32.totalorder %s27, 1
    %p150 = por %p148, %p149
    %p151 = scmp.ne.s32.totalorder %s142, %s143
    %p152 = scmp.eq.s32.totalorder %s27, 0
    %p153 = por %p151, %p152
    %p154 = scmp.ne.s32.totalorder %s142, %s143
    %p155 = scmp.eq.s32.totalorder %s28, 1
    %p156 = por %p154, %p155
    %p158 = scmp.ne.s32.totalorder %s143, %s157
    %p159 = scmp.eq.s32.totalorder %s28, 0
    %p160 = por %p158, %p159
    %s162 = sadd.s32 %s161, 1
    %p165 = scmp.eq.s32.totalorder %s22, 1
    %p166 = scmp.ne.s32.totalorder %s161, %s163
    %p167 = scmp.eq.s32.totalorder %s22, 0
    %p168 = por %p166, %p167
    %p169 = scmp.ne.s32.totalorder %s161, %s163
    %p170 = scmp.eq.s32.totalorder %s27, 1
    %p171 = por %p169, %p170
    %p172 = scmp.ne.s32.totalorder %s163, %s164
    %p173 = scmp.eq.s32.totalorder %s27, 0
    %p174 = por %p172, %p173
    %p175 = scmp.ne.s32.totalorder %s163, %s164
    %p176 = scmp.eq.s32.totalorder %s28, 1
    %p177 = por %p175, %p176
    %p179 = scmp.ne.s32.totalorder %s164, %s178
    %p180 = scmp.eq.s32.totalorder %s28, 0
    %p181 = por %p179, %p180
    %s182 = ssub.s32 %s22, %s29
    %p183 = scmp.eq.s32.totalorder %s182, 0
    %s185 = sadd.s32 %s184, 1
    %s186 = scalar_select %p183, %s184, %s185
    %p189 = pneg %p183
    %p190 = scmp.eq.s32.totalorder %s22, 1
    %p191 = por %p189, %p190
    %p192 = scmp.ne.s32.totalorder %s184, %s187
    %p193 = scmp.eq.s32.totalorder %s22, 0
    %p194 = por %p192, %p193
    %p195 = scmp.ne.s32.totalorder %s184, %s187
    %p196 = scmp.eq.s32.totalorder %s27, 1
    %p197 = por %p195, %p196
    %p198 = scmp.ne.s32.totalorder %s187, %s188
    %p199 = scmp.eq.s32.totalorder %s27, 0
    %p200 = por %p198, %p199
    %p201 = scmp.ne.s32.totalorder %s187, %s188
    %p202 = scmp.eq.s32.totalorder %s28, 1
    %p203 = por %p201, %p202
    %p205 = scmp.ne.s32.totalorder %s188, %s204
    %p206 = scmp.eq.s32.totalorder %s28, 0
    %p207 = por %p205, %p206
    %p208 = scmp.le.s32.totalorder 1, %s22
    %p209 = scmp.lt.s32.totalorder %s22, 3
    %p210 = pnand %p208, %p209
    %p211 = pneg %p210
    // Predicated region
    $region9: #{bert_text_tagging_forward.4} parent=5 // pred_check
      _
    $region10: #{bert_text_tagging_forward.4} parent=5 // pred_check_branch
      %213 = sbr.rel (%p210) target = $region12
    $region11: #{bert_text_tagging_forward.4} parent=5 // pred_region
      %s214 = ssub.s32 %s22, 1
      // Predicated region
      $region13: #{bert_text_tagging_forward.4} parent=11 // pred_check
        %p215 = pneg %p69
      $region14: #{bert_text_tagging_forward.4} parent=11 // pred_check_branch
        %217 = sbr.rel (%p215) target = $region16
      $region15: #{bert_text_tagging_forward.4} parent=11 // pred_region
        _
      $region16: #{bert_text_tagging_forward.4} parent=11 // pred_fallthru
        _
      // Predicated region
      $region17: #{bert_text_tagging_forward.4} parent=11 // pred_check
        %p218 = pneg %p90
      $region18: #{bert_text_tagging_forward.4} parent=11 // pred_check_branch
        %220 = sbr.rel (%p218) target = $region20
      $region19: #{bert_text_tagging_forward.4} parent=11 // pred_region
        _
      $region20: #{bert_text_tagging_forward.4} parent=11 // pred_fallthru
        _
      // Predicated region
      $region21: #{bert_text_tagging_forward.4} parent=11 // pred_check
        %p221 = pneg %p111
      $region22: #{bert_text_tagging_forward.4} parent=11 // pred_check_branch
        %223 = sbr.rel (%p221) target = $region24
      $region23: #{bert_text_tagging_forward.4} parent=11 // pred_region
        _
      $region24: #{bert_text_tagging_forward.4} parent=11 // pred_fallthru
        _
      // Predicated region
      $region25: #{bert_text_tagging_forward.4} parent=11 // pred_check
        %p224 = pneg %p132
      $region26: #{bert_text_tagging_forward.4} parent=11 // pred_check_branch
        %226 = sbr.rel (%p224) target = $region28
      $region27: #{bert_text_tagging_forward.4} parent=11 // pred_region
        _
      $region28: #{bert_text_tagging_forward.4} parent=11 // pred_fallthru
        _
      // Predicated region
      $region29: #{bert_text_tagging_forward.4} parent=11 // pred_check
        %p227 = pneg %p153
      $region30: #{bert_text_tagging_forward.4} parent=11 // pred_check_branch
        %229 = sbr.rel (%p227) target = $region32
      $region31: #{bert_text_tagging_forward.4} parent=11 // pred_region
        _
      $region32: #{bert_text_tagging_forward.4} parent=11 // pred_fallthru
        _
      // Predicated region
      $region33: #{bert_text_tagging_forward.4} parent=11 // pred_check
        %p230 = pneg %p174
      $region34: #{bert_text_tagging_forward.4} parent=11 // pred_check_branch
        %232 = sbr.rel (%p230) target = $region36
      $region35: #{bert_text_tagging_forward.4} parent=11 // pred_region
        _
      $region36: #{bert_text_tagging_forward.4} parent=11 // pred_fallthru
        _
    $region12: #{bert_text_tagging_forward.4} parent=5 // pred_fallthru
      _
    %p233 = scmp.lt.s32.totalorder %s22, 2
    // Predicated region
    $region37: #{bert_text_tagging_forward.4} parent=5 // pred_check
      %p234 = pneg %p233
    $region38: #{bert_text_tagging_forward.4} parent=5 // pred_check_branch
      %236 = sbr.rel (%p234) target = $region40
    $region39: #{bert_text_tagging_forward.4} parent=5 // pred_region
      // Predicated region
      $region41: #{bert_text_tagging_forward.4} parent=39 // pred_check
        %p237 = pneg %p42
      $region42: #{bert_text_tagging_forward.4} parent=39 // pred_check_branch
        %239 = sbr.rel (%p237) target = $region44
      $region43: #{bert_text_tagging_forward.4} parent=39 // pred_region
        %p240 = scmp.lt.s32.totalorder %s22, 1
        %s241 = scalar_select %p240, %s22, 1
        %s242 = smul.addr %s241, 4
        %s243 = scalar_lea.vmem %s1, %s242
      $region44: #{bert_text_tagging_forward.4} parent=39 // pred_fallthru
        _
    $region40: #{bert_text_tagging_forward.4} parent=5 // pred_fallthru
      _
    %p244 = scmp.le.s32.totalorder 1, %s22
    %p245 = scmp.lt.s32.totalorder %s22, 3
    %p246 = pnand %p244, %p245
    %p247 = pneg %p246
    // Predicated region
    $region45: #{bert_text_tagging_forward.4} parent=5 // pred_check
      _
    $region46: #{bert_text_tagging_forward.4} parent=5 // pred_check_branch
      %249 = sbr.rel (%p246) target = $region48
    $region47: #{bert_text_tagging_forward.4} parent=5 // pred_region
      %s250 = ssub.s32 %s22, 1
      %p251 = scmp.lt.s32.totalorder %s27, 1
      %s252 = scalar_select %p251, %s27, 1
      %s253 = smul.addr %s252, 4
      %s254 = scalar_lea.vmem %s1, %s253
      %p255 = pneg %p48
      %p256 = pneg %p45
      %p257 = pneg %p69
      %p258 = pneg %p66
      %p259 = pneg %p90
      %p260 = pneg %p87
      %p261 = pneg %p111
      %p262 = pneg %p108
      %p263 = pneg %p132
      %p264 = pneg %p129
      %p265 = pneg %p153
      %p266 = pneg %p150
      %p267 = pneg %p174
      %p268 = pneg %p171
      %p269 = pneg %p200
      %p270 = pneg %p197
      %p271 = scmp.lt.s32.totalorder %s27, 1
      %s272 = scalar_select %p271, %s27, 1
      %s273 = smul.addr %s272, 4
      %s274 = scalar_lea.vmem %s8, %s273
      %p275 = scmp.lt.s32.totalorder %s27, 1
      %s276 = scalar_select %p275, %s27, 1
      %s277 = smul.addr %s276, 4
      %s278 = scalar_lea.vmem %s1, %s277
      %p279 = scmp.lt.s32.totalorder %s27, 1
      %s280 = scalar_select %p279, %s27, 1
      %s281 = smul.addr %s280, 4
      %s282 = scalar_lea.vmem %s8, %s281
      %s284 = sld [smem:[#allocation4 + %s27]]
      %v285 = vld [vmem:[%s278] sm:$0xf]
      %v286 = vld [vmem:[%s2] sm:$0xf]
      %v287 = vld [vmem:[%s2 + $0x4] sm:$0xf]
      %v288 = vld [vmem:[%s2 + $0x8] sm:$0xf]
      %v289 = vld [vmem:[%s2 + $0xc] sm:$0xf]
      %v290 = vld [vmem:[%s3] sm:$0x1]
      %v292 = vperm.slane %v290, 0
      %v298 = vunpack.c.l.b16 %v286
      %v299 = vunpack.c.l.b16 %v287
      %v300 = vunpack.c.l.b16 %v288
      %v301 = vunpack.c.l.b16 %v289
      %v302 = vpack.c.b16 %v299, %v298
      %v303 = vpack.c.b16 %v301, %v300
      %vm306 = vcmask 261120
      %v308 = vsel %vm306, %v285, 0
      %310 = vmatpush.bf16.msra.mxu0 0
      %311 = vmatpush.bf16.msra.mxu0 0
      %312 = vmatpush.bf16.msra.mxu0 0
      %313 = vmatpush.bf16.msra.mxu0 0
      %314 = vmatpush.bf16.msra.mxu0 0
      %315 = vmatpush.bf16.msra.mxu0 0
      %316 = vmatpush.bf16.msra.mxu0 %v303
      %317 = vmatpush.bf16.msra.mxu0 %v302
      %318 = vmatmul.bf16.gmra.mxu0 %v308
      %v319 = vpop.f32.mrf.mxu0
      %v320 = vadd.f32 %v292, %v319
      %v321 = vpop.f32.mrf.mxu0
      %322 = vdwg.mxu0
      %v323 = vpack.c.bf16 %v320, %v320
      %v324 = vlaneseq
      %v325 = vand.u32 %v324, 127
      %v326 = vstv %s284
      %vm327 = vcmp.lt.s32.totalorder %v325, %v326
      %v328 = vsel %vm327, 0.0, -1000000.0
      %v330 = vunpack.c.l.b16 %v323
      %v331 = vpack.c.b16 %v330, %v330
      %332 = vrot.lane.b32.xlu0 %v331, 96
      %v333 = vpop.permute.xlu0 %332
      %vm334 = vcmask 130048
      %v336 = vsel %vm334, %v323, 0
      %v339 = vsel %vm334, %v333, 0
      %341 = vmatpush.bf16.xpose.msra.mxu0 0
      %342 = vmatpush.bf16.xpose.msra.mxu0 0
      %343 = vmatpush.bf16.xpose.msra.mxu0 0
      %344 = vmatpush.bf16.xpose.msra.mxu0 0
      %345 = vmatpush.bf16.xpose.msra.mxu0 0
      %346 = vmatpush.bf16.xpose.msra.mxu0 0
      %347 = vmatpush.bf16.xpose.msra.mxu0 0
      %348 = vmatpush.bf16.xpose.msra.mxu0 %v339
      %349 = vmatmul.bf16.gmra.mxu0 %v336
      %v350 = vpop.f32.mrf.mxu0
      %v351 = vadd.f32 %v328, %v350
      %v352 = vpop.f32.mrf.mxu0
      %353 = vdwg.mxu0
      %vm354 = vcmask 64512
      %v355 = vsel %vm354, %v351, -inf
      %356 = vmax.xlane.f32.xlu0 %v355
      %v357 = vpop.xlane.xlu0 %356
      %v358 = vsub.f32 %v351, %v357
      %v359 = vmul.f32 %v358, 1.442695
      %v360 = vpow.pop %v359
      %v361 = vsel %vm354, %v360, 0.0
      %362 = vadd.xlane.f32.xlu0 %v361
      %v363 = vpop.xlane.xlu0 %362
      %v364 = vpack.c.bf16 %v360, %v360
      %365 = vrot.lane.b32.xlu0 %v331, 64
      %v366 = vpop.permute.xlu0 %365
      %v368 = vsel %vm354, %v364, 0
      %vm370 = vcmask 1043456
      %v372 = vsel %vm370, %v366, 0
      %374 = vmatpush.bf16.msra.mxu0 0
      %375 = vmatpush.bf16.msra.mxu0 0
      %376 = vmatpush.bf16.msra.mxu0 0
      %377 = vmatpush.bf16.msra.mxu0 0
      %378 = vmatpush.bf16.msra.mxu0 0
      %379 = vmatpush.bf16.msra.mxu0 0
      %380 = vmatpush.bf16.msra.mxu0 0
      %381 = vmatpush.bf16.msra.mxu0 %v372
      %382 = vmatmul.bf16.gmra.mxu0 %v368
      %v383 = vpop.f32.mrf.mxu0
      %v384 = vadd.f32 0.0, %v383
      %v385 = vpop.f32.mrf.mxu0
      %386 = vdwg.mxu0
      %v387 = vrcp.pop %v363
      %v388 = vmul.f32 %v384, %v387
      %389 = vst.msk [vmem:[#allocation2] sm:$0xff] %vm334, %v388
      %390 = vrot.lane.b32.xlu0 %v331, 112
      %v391 = vpop.permute.xlu0 %390
      %392 = vrot.lane.b32.xlu0 %v331, 80
      %v393 = vpop.permute.xlu0 %392
      %v395 = vsel %vm334, %v391, 0
      %v398 = vsel %vm334, %v393, 0
      %400 = vmatpush.bf16.xpose.msra.mxu0 0
      %401 = vmatpush.bf16.xpose.msra.mxu0 0
      %402 = vmatpush.bf16.xpose.msra.mxu0 0
      %403 = vmatpush.bf16.xpose.msra.mxu0 0
      %404 = vmatpush.bf16.xpose.msra.mxu0 0
      %405 = vmatpush.bf16.xpose.msra.mxu0 0
      %406 = vmatpush.bf16.xpose.msra.mxu0 0
      %407 = vmatpush.bf16.xpose.msra.mxu0 %v398
      %408 = vmatmul.bf16.gmra.mxu0 %v395
      %v409 = vpop.f32.mrf.mxu0
      %v410 = vadd.f32 %v328, %v409
      %v411 = vpop.f32.mrf.mxu0
      %412 = vdwg.mxu0
      %v413 = vsel %vm354, %v410, -inf
      %414 = vmax.xlane.f32.xlu0 %v413
      %v415 = vpop.xlane.xlu0 %414
      %v416 = vsub.f32 %v410, %v415
      %v417 = vmul.f32 %v416, 1.442695
      %v418 = vpow.pop %v417
      %v419 = vsel %vm354, %v418, 0.0
      %420 = vadd.xlane.f32.xlu0 %v419
      %v421 = vpop.xlane.xlu0 %420
      %v422 = vpack.c.bf16 %v418, %v418
      %423 = vrot.lane.b32.xlu0 %v331, 48
      %v424 = vpop.permute.xlu0 %423
      %v426 = vsel %vm354, %v422, 0
      %v429 = vsel %vm370, %v424, 0
      %431 = vmatpush.bf16.msra.mxu0 0
      %432 = vmatpush.bf16.msra.mxu0 0
      %433 = vmatpush.bf16.msra.mxu0 0
      %434 = vmatpush.bf16.msra.mxu0 0
      %435 = vmatpush.bf16.msra.mxu0 0
      %436 = vmatpush.bf16.msra.mxu0 0
      %437 = vmatpush.bf16.msra.mxu0 0
      %438 = vmatpush.bf16.msra.mxu0 %v429
      %439 = vmatmul.bf16.gmra.mxu0 %v426
      %v440 = vpop.f32.mrf.mxu0
      %v441 = vadd.f32 0.0, %v440
      %v442 = vpop.f32.mrf.mxu0
      %443 = vdwg.mxu0
      %v444 = vrcp.pop %v421
      %v445 = vmul.f32 %v441, %v444
      %447 = vrot.lane.b32.xlu0 %v445, 16
      %v448 = vpop.permute.xlu0 %447
      %vm450 = vcmask 261248
      %451 = vst.msk [vmem:[#allocation2] sm:$0xff] %vm450, %v448
      %v452 = vld [vmem:[#allocation2] sm:$0xff]
      %v453 = vpack.c.bf16 %v452, %v452
      %v454 = vld [vmem:[%s4] sm:$0xf]
      %v455 = vld [vmem:[%s4 + $0x4] sm:$0xf]
      %v456 = vld [vmem:[%s4 + $0x8] sm:$0xf]
      %v457 = vld [vmem:[%s4 + $0xc] sm:$0xf]
      %v458 = vld [vmem:[%s5] sm:$0x1]
      %v460 = vperm.slane %v458, 0
      %v466 = vunpack.c.l.b16 %v454
      %v467 = vunpack.c.l.b16 %v455
      %v468 = vunpack.c.l.b16 %v456
      %v469 = vunpack.c.l.b16 %v457
      %v470 = vpack.c.b16 %v467, %v466
      %v471 = vpack.c.b16 %v469, %v468
      %v475 = vsel %vm306, %v453, 0
      %477 = vmatpush.bf16.msra.mxu0 0
      %478 = vmatpush.bf16.msra.mxu0 0
      %479 = vmatpush.bf16.msra.mxu0 0
      %480 = vmatpush.bf16.msra.mxu0 0
      %481 = vmatpush.bf16.msra.mxu0 0
      %482 = vmatpush.bf16.msra.mxu0 0
      %483 = vmatpush.bf16.msra.mxu0 %v471
      %484 = vmatpush.bf16.msra.mxu0 %v470
      %485 = vmatmul.bf16.gmra.mxu0 %v475
      %v486 = vpop.f32.mrf.mxu0
      %v487 = vadd.f32 %v460, %v486
      %v488 = vpop.f32.mrf.mxu0
      %489 = vdwg.mxu0
      %v490 = vunpack.c.l.bf16 %v285
      %v491 = vadd.f32 %v490, %v487
      %v492 = vsel %vm306, %v491, 0.0
      %493 = vadd.xlane.f32.xlu0 %v492
      %v494 = vpop.xlane.xlu0 %493
      %v495 = vrcp.pop 32.0
      %v496 = vmul.f32 32.0, %v495
      %v497 = vsub.f32 1.0, %v496
      %v498 = vmul.f32 %v495, %v497
      %v499 = vadd.f32 %v495, %v498
      %vm500 = vweird.f32 %v495
      %v501 = vsel %vm500, %v495, %v499
      %v502 = vmul.f32 %v494, %v501
      %v503 = vsub.f32 %v491, %v502
      %v504 = vmul.f32 %v503, %v503
      %v505 = vsel %vm306, %v504, 0.0
      %506 = vadd.xlane.f32.xlu0 %v505
      %v507 = vpop.xlane.xlu0 %506
      %v508 = vmul.f32 %v507, %v501
      %v509 = vadd.f32 %v508, 1e-05
      %v510 = vrsqrt.pop %v509
      %v511 = vmul.f32 %v510, %v509
      %v512 = vmul.f32 %v511, %v510
      %v513 = vmul.f32 0.5, %v512
      %v514 = vsub.f32 1.5, %v513
      %v515 = vmul.f32 %v510, %v514
      %vm516 = vweird.f32 %v509
      %vm517 = vweird.f32 %v510
      %vm518 = vmor %vm516, %vm517
      %v519 = vsel %vm518, %v510, %v515
      %v520 = vmul.f32 %v503, %v519
      %v521 = vld [vmem:[%s6] sm:$0x1]
      %v523 = vperm.slane %v521, 0
      %v525 = vmul.f32 %v520, %v523
      %v526 = vld [vmem:[%s7] sm:$0x1]
      %v528 = vperm.slane %v526, 0
      %v530 = vadd.f32 %v525, %v528
      %v531 = vpack.c.bf16 %v530, %v530
      %vm532 = vcmask 257024
      %533 = vst.msk [vmem:[%s282] sm:$0xf] %vm532, %v531
      %p534 = scmp.lt.s32.totalorder %s27, 1
      %s535 = scalar_select %p534, %s27, 1
      %s536 = smul.addr %s535, 4
      %s537 = scalar_lea.vmem %s8, %s536
      // Predicated region
      $region49: #{bert_text_tagging_forward.4} parent=47 // pred_check
        %p538 = pneg %p197
      $region50: #{bert_text_tagging_forward.4} parent=47 // pred_check_branch
        %540 = sbr.rel (%p538) target = $region52
      $region51: #{bert_text_tagging_forward.4} parent=47 // pred_region
        _
      $region52: #{bert_text_tagging_forward.4} parent=47 // pred_fallthru
        _
    $region48: #{bert_text_tagging_forward.4} parent=5 // pred_fallthru
      _
    %p541 = scmp.le.s32.totalorder 2, %s22
    // Predicated region
    $region53: #{bert_text_tagging_forward.4} parent=5 // pred_check
      %p542 = pneg %p541
    $region54: #{bert_text_tagging_forward.4} parent=5 // pred_check_branch
      %544 = sbr.rel (%p542) target = $region56
    $region55: #{bert_text_tagging_forward.4} parent=5 // pred_region
      %s545 = ssub.s32 %s22, 2
      // Predicated region
      $region57: #{bert_text_tagging_forward.4} parent=55 // pred_check
        %p546 = pneg %p203
      $region58: #{bert_text_tagging_forward.4} parent=55 // pred_check_branch
        %548 = sbr.rel (%p546) target = $region60
      $region59: #{bert_text_tagging_forward.4} parent=55 // pred_region
        %p549 = scmp.lt.s32.totalorder %s28, 1
        %s550 = scalar_select %p549, %s28, 1
        %s551 = smul.addr %s550, 4
        %s552 = scalar_lea.vmem %s8, %s551
      $region60: #{bert_text_tagging_forward.4} parent=55 // pred_fallthru
        _
    $region56: #{bert_text_tagging_forward.4} parent=5 // pred_fallthru
      _
  $region6: #{bert_text_tagging_forward.4} parent=0 // loop_footer
    %s26 = sadd.s32 1, %s22
  $region7: #{bert_text_tagging_forward.4} parent=0 // loop_footer_branch
    %21 = sbr.rel target = $region3
  $region8: #{bert_text_tagging_forward.4} parent=0 // loop_exit
    _

</llo_original>
